<compile_context>
chip_gen: v7x
topology: tpu7x:2x2x1
jax: 0.10.0
libtpu: 0.0.40
codegen_flags: <defaults>
</compile_context>

<pallas_src>
import math

import jax
import jax.numpy as jnp
import numpy as np
from jax.experimental import pallas as pl
from jax.experimental.pallas import tpu as pltpu

LN_EPS = 1e-7                 # config.layer_norm_eps
INV_SQRT2 = 1.0 / math.sqrt(2.0)
_V_ALIGN = 2048               # vocab padded once to a multiple of this


def _round_up(a, b):
    return ((a + b - 1) // b) * b


# ---------------------------------------------------------------------------
# Pallas kernel: one (token-tile, vocab-tile) grid step.
# ---------------------------------------------------------------------------
def _mlm_head_kernel(x_ref, w1t_ref, b1_ref, embt_ref, b2_ref, o_ref, h_ref):
    # h_ref: (TN, H) bf16 scratch holding the post-LN2 hidden activation,
    # computed only on the first vocab tile (j == 0) and reused afterwards.
    # NOTE: this is only correct while the vocab grid axis is sequential
    # ("arbitrary") and innermost — do not mark it parallel.
    @pl.when(pl.program_id(1) == 0)
    def _compute_hidden():
        x = x_ref[...].astype(jnp.float32)                          # (TN, H)

        # --- LayerNorm #1 (elementwise_affine=False), two-pass centered ---
        mu = jnp.mean(x, axis=-1, keepdims=True)
        xc = x - mu
        var = jnp.mean(xc * xc, axis=-1, keepdims=True)
        xn = xc * jax.lax.rsqrt(var + LN_EPS)

        # --- Linear(H, H): xn @ W1^T (W1^T pre-materialized as w1t) ---
        h = jnp.dot(xn.astype(jnp.bfloat16), w1t_ref[...],
                    preferred_element_type=jnp.float32) + b1_ref[...]

        # --- GELU (exact, erf-based, matching torch.nn.GELU default) ---
        h = 0.5 * h * (1.0 + jax.lax.erf(h * INV_SQRT2))

        # --- LayerNorm #2 (elementwise_affine=False) ---
        mu2 = jnp.mean(h, axis=-1, keepdims=True)
        hc = h - mu2
        var2 = jnp.mean(hc * hc, axis=-1, keepdims=True)
        hn = hc * jax.lax.rsqrt(var2 + LN_EPS)

        # --- Dropout: identity (eval mode) ---
        # TODO(synk): training-mode dropout would use pltpu.prng_seed / prng_random_bits.
        h_ref[...] = hn.astype(jnp.bfloat16)

    # --- Linear(H, V), vocab tile: logits = h @ E^T_tile + b2_tile ---
    logits = jnp.dot(h_ref[...], embt_ref[...],
                     preferred_element_type=jnp.float32)
    o_ref[...] = (logits + b2_ref[...]).astype(o_ref.dtype)


# ---------------------------------------------------------------------------
# Tile planning / VMEM budgeting.
# ---------------------------------------------------------------------------
def _vmem_budget_bytes():
    try:
        cap = int(pltpu.get_tpu_info().vmem_capacity_bytes)
    except Exception:
        cap = 64 << 20                      # conservative (v7x physical VMEM)
    return (cap * 3) // 4                   # leave ~25% for Mosaic internals


def _vmem_need(tn, tv, H, emb_bufs, out_bytes):
    return (2 * tn * H * 4                  # x tile, double-buffered f32
            + H * H * 2                     # W1^T bf16, single-buffered
            + H * 4                         # b1, single-buffered
            + emb_bufs * tv * H * 2         # embedding tile(s), bf16
            + emb_bufs * tv * 4             # b2 tile(s)
            + 2 * tn * tv * out_bytes       # output tile, double-buffered
            + tn * H * 2)                   # h scratch (bf16)


def _plan(n, H, v_pad, out_bytes):
    budget = _vmem_budget_bytes()
    n_ceil = _round_up(max(n, 1), 8)
    if n_ceil > 256:
        # Cap tn so there are >= 2 token tiles: both v7x TensorCores get work.
        tn_cap = _round_up(-(-n_ceil // 2), 256)
    else:
        tn_cap = n_ceil
    tn_cands = [t for t in (2048, 1024, 512, 256) if t <= tn_cap] or [tn_cap]

    # 1) Full-embedding residency: embedding read from HBM exactly once.
    for tn in tn_cands:
        if _vmem_need(tn, v_pad, H, 1, out_bytes) <= budget:
            return tn, v_pad, budget
    # 2) Streamed vocab tiles; maximize tn first (emb traffic ~ n_tiles*V*H*2).
    for tn in tn_cands:
        for tv in (2048, 1024, 512, 256, 128):
            if tv <= v_pad and _vmem_need(tn, tv, H, 2, out_bytes) <= budget:
                return tn, tv, budget
    return tn_cands[-1], min(128, v_pad), budget


def _spec(shape, index_map, n_buf=None):
    if n_buf is None:
        return pl.BlockSpec(shape, index_map)
    try:
        return pl.BlockSpec(shape, index_map, pipeline_mode=pl.Buffered(n_buf))
    except TypeError:                        # older jax without pipeline_mode
        return pl.BlockSpec(shape, index_map)


# ---------------------------------------------------------------------------
# Head application: rows [N, H] -> logits [N, V].
# ---------------------------------------------------------------------------
def _apply_head(head, rows, *, out_dtype=jnp.float32, tn=None, tv=None):
    H, V, v_pad = head["H"], head["V"], head["v_pad"]
    n = rows.shape[0]
    out_bytes = jnp.dtype(out_dtype).itemsize

    auto_tn, auto_tv, _ = _plan(n, H, v_pad, out_bytes)
    tn = auto_tn if tn is None else _round_up(int(tn), 8)
    tv = auto_tv if tv is None else _round_up(int(tv), 128)
    assert v_pad % tv == 0, "tv must divide the padded vocab"
    emb_bufs = 1 if tv >= v_pad else 2

    n_pad = _round_up(max(n, 1), tn)
    rows_p = jnp.pad(rows.astype(jnp.float32), ((0, n_pad - n), (0, 0)))

    need = _vmem_need(tn, tv, H, emb_bufs, out_bytes)
    vmem_limit = int(max(need + (4 << 20), 32 << 20))

    const_buf = 1 if emb_bufs == 1 else None   # resident emb/b2: single buffer

    out = pl.pallas_call(
        _mlm_head_kernel,
        out_shape=jax.ShapeDtypeStruct((n_pad, v_pad), out_dtype),
        grid_spec=pltpu.PrefetchScalarGridSpec(
            num_scalar_prefetch=0,
            grid=(n_pad // tn, v_pad // tv),
            in_specs=[
                pl.BlockSpec((tn, H), lambda i, j: (i, 0)),          # x rows
                _spec((H, H), lambda i, j: (0, 0), n_buf=1),          # W1^T
                _spec((1, H), lambda i, j: (0, 0), n_buf=1),          # b1
                _spec((H, tv), lambda i, j: (0, j), n_buf=const_buf), # emb^T tile
                _spec((1, tv), lambda i, j: (0, j), n_buf=const_buf), # b2 tile
            ],
            out_specs=pl.BlockSpec((tn, tv), lambda i, j: (i, j)),
            scratch_shapes=[pltpu.VMEM((tn, H), jnp.bfloat16)],
        ),
        compiler_params=pltpu.CompilerParams(
            dimension_semantics=("parallel", "arbitrary"),
            vmem_limit_bytes=vmem_limit),
    )(rows_p, head["w1_t"], head["b1"], head["emb_t"], head["b2"])
    return out[:n, :V]


# ---------------------------------------------------------------------------
# Module-equivalent wrapper (mirrors MaskClassifier.forward control flow).
# ---------------------------------------------------------------------------
def mask_classifier_forward(head, x, masked_lm_labels, num_masked=None,
                            return_all=False, *, out_dtype=jnp.float32,
                            tn=None, tv=None):
    B, S, H = x.shape
    if num_masked is None:
        flat = x.reshape(B * S, H)
        if return_all:
            return _apply_head(head, flat, out_dtype=out_dtype, tn=tn, tv=tv)
        labels = np.asarray(masked_lm_labels).reshape(-1)
        # TODO(synk): host-side nonzero (dynamic shapes, matches torch.nonzero);
        # with a static max-masked-token bound this could be a device-side
        # padded gather to avoid the per-call host round trip.
        idx = np.nonzero(labels != -100)[0]
        rows = jnp.take(flat, jnp.asarray(idx, jnp.int32), axis=0)
        return _apply_head(head, rows, out_dtype=out_dtype, tn=tn, tv=tv)
    else:
        masked_x, causal_x = x[:, :num_masked], x[:, num_masked:]
        lbl = np.asarray(masked_lm_labels)
        mntp_lbl, causal_lbl = lbl[:, :num_masked], lbl[:, num_masked:]
        out_m = None
        out_c = None
        if masked_x.shape[1] != 0:
            idx = np.nonzero(mntp_lbl.reshape(-1) != -100)[0]
            rows = jnp.take(masked_x.reshape(-1, H), jnp.asarray(idx, jnp.int32), axis=0)
            out_m = _apply_head(head, rows, out_dtype=out_dtype, tn=tn, tv=tv)
        if causal_x.shape[1] != 0:
            idx = np.nonzero(causal_lbl.reshape(-1) != -100)[0]
            rows = jnp.take(causal_x.reshape(-1, H), jnp.asarray(idx, jnp.int32), axis=0)
            out_c = _apply_head(head, rows, out_dtype=out_dtype, tn=tn, tv=tv)
        return out_m, out_c


# ---------------------------------------------------------------------------
# Parameter init (matches MaskClassifier.initialize) + one-time weight prep.
# ---------------------------------------------------------------------------
def init_params(key, hidden_size, vocab_size):
    k_w1, k_emb = jax.random.split(key)
    std = math.sqrt(2.0 / (5.0 * hidden_size))
    w1 = (jax.random.truncated_normal(k_w1, -2.0, 2.0,
                                      (hidden_size, hidden_size)) * std
          ).astype(jnp.float32)                      # nn.Linear weight [out, in]
    b1 = jnp.zeros((hidden_size,), jnp.float32)
    emb = (jax.random.normal(k_emb, (vocab_size, hidden_size)) * 0.02
           ).astype(jnp.float32)                     # subword_embedding [V, H]
    b2 = jnp.zeros((vocab_size,), jnp.float32)
    return {"w1": w1, "b1": b1, "emb": emb, "b2": b2}


def prepare_head_params(params, *, v_align=_V_ALIGN):
    """One-time cast/transpose/pad of the head weights (done ONCE, not per call)."""
    w1, b1, emb, b2 = params["w1"], params["b1"], params["emb"], params["b2"]
    H = w1.shape[0]
    V = emb.shape[0]
    v_pad = _round_up(V, v_align)
    head = {
        "w1_t": jnp.asarray(w1, jnp.float32).astype(jnp.bfloat16).T,          # [in, out]
        "b1": jnp.asarray(b1, jnp.float32).reshape(1, H),
        "emb_t": jnp.pad(jnp.asarray(emb, jnp.float32).astype(jnp.bfloat16).T,
                         ((0, 0), (0, v_pad - V))),                            # [H, Vp]
        "b2": jnp.pad(jnp.asarray(b2, jnp.float32), (0, v_pad - V)).reshape(1, v_pad),
        "H": H, "V": V, "v_pad": v_pad,
    }
    return jax.tree_util.tree_map(lambda a: a, head)


def _reference(params, rows):
    """Pure-JAX reference with matching bf16 matmul operand precision."""
    x = rows.astype(jnp.float32)
    mu = x.mean(-1, keepdims=True)
    xc = x - mu
    var = (xc * xc).mean(-1, keepdims=True)
    xn = (xc * jax.lax.rsqrt(var + LN_EPS)).astype(jnp.bfloat16)
    h = jnp.dot(xn, params["w1"].astype(jnp.bfloat16).T,
                preferred_element_type=jnp.float32) + params["b1"]
    h = 0.5 * h * (1.0 + jax.lax.erf(h * INV_SQRT2))
    mu2 = h.mean(-1, keepdims=True)
    hc = h - mu2
    var2 = (hc * hc).mean(-1, keepdims=True)
    hn = (hc * jax.lax.rsqrt(var2 + LN_EPS)).astype(jnp.bfloat16)
    return jnp.dot(hn, params["emb"].astype(jnp.bfloat16).T,
                   preferred_element_type=jnp.float32) + params["b2"]


if __name__ == "__main__":
    H, V = 128, 512
    key = jax.random.PRNGKey(0)
    k_params, k_x1, k_x2 = jax.random.split(key, 3)
    params = init_params(k_params, H, V)
    head = prepare_head_params(params)      # one-time bf16 / transpose / pad prep

    # --- Test 1: masked-token gather path, auto tile plan (resident emb) ---
    B, S = 2, 8
    x = jax.random.normal(k_x1, (B, S, H), jnp.float32)
    labels = np.full((B, S), -100, dtype=np.int32)
    labels[:, ::3] = 7   # arbitrary non -100 token ids at masked positions

    logits = mask_classifier_forward(head, x, labels)
    logits = jax.block_until_ready(logits)
    idx = np.nonzero(labels.reshape(-1) != -100)[0]
    ref = _reference(params, x.reshape(B * S, H)[jnp.asarray(idx)])
    assert logits.shape == (len(idx), V)
    np.testing.assert_allclose(np.asarray(logits), np.asarray(ref),
                               rtol=1e-2, atol=1e-2)

    # --- Test 2: return_all, forced streamed multi-tile grid + bf16 logits ---
    B2, S2 = 2, 256
    x2 = jax.random.normal(k_x2, (B2, S2, H), jnp.float32)
    logits_all = mask_classifier_forward(head, x2, None, return_all=True,
                                         out_dtype=jnp.bfloat16, tn=256, tv=256)
    logits_all = jax.block_until_ready(logits_all)
    ref_all = _reference(params, x2.reshape(B2 * S2, H))
    assert logits_all.shape == (B2 * S2, V)
    np.testing.assert_allclose(np.asarray(logits_all.astype(jnp.float32)),
                               np.asarray(ref_all), rtol=2e-2, atol=2e-2)

    # --- Test 3: num_masked split path (MNTP / causal halves) ---
    out_m, out_c = mask_classifier_forward(head, x, labels, num_masked=4)
    out_m = jax.block_until_ready(out_m)
    out_c = jax.block_until_ready(out_c)
    idx_m = np.nonzero(labels[:, :4].reshape(-1) != -100)[0]
    idx_c = np.nonzero(labels[:, 4:].reshape(-1) != -100)[0]
    ref_m = _reference(params, x[:, :4].reshape(-1, H)[jnp.asarray(idx_m)])
    ref_c = _reference(params, x[:, 4:].reshape(-1, H)[jnp.asarray(idx_c)])
    np.testing.assert_allclose(np.asarray(out_m), np.asarray(ref_m), rtol=1e-2, atol=1e-2)
    np.testing.assert_allclose(np.asarray(out_c), np.asarray(ref_c), rtol=1e-2, atol=1e-2)

    print("KERNEL_OK")
</pallas_src>

<mosaic_0001>
module attributes {stable_mosaic.version = 11 : i64} {
  func.func @_mlm_head_kernel(%arg0: i32, %arg1: i32, %arg2: memref<8x128xf32, #tpu.memory_space<vmem>>, %arg3: memref<128x128xbf16, #tpu.memory_space<vmem>>, %arg4: memref<1x128xf32, #tpu.memory_space<vmem>>, %arg5: memref<128x2048xbf16, #tpu.memory_space<vmem>>, %arg6: memref<1x2048xf32, #tpu.memory_space<vmem>>, %arg7: memref<8x2048xf32, #tpu.memory_space<vmem>>, %arg8: memref<8x128xbf16, #tpu.memory_space<vmem>>) attributes {dimension_semantics = [#tpu.dimension_semantics<parallel>, #tpu.dimension_semantics<arbitrary>], iteration_bounds = array<i64: 1, 1>, scalar_prefetch = 0 : i64, scratch_operands = 1 : i64, tpu.core_type = #tpu.core_type<tc>, window_params = [{transform_indices = @transform_0, window_bounds = array<i64: 8, 128>}, {pipeline_mode = #tpu.pipeline_mode<synchronous>, transform_indices = @transform_1, window_bounds = array<i64: 128, 128>}, {pipeline_mode = #tpu.pipeline_mode<synchronous>, transform_indices = @transform_2, window_bounds = array<i64: 1, 128>}, {pipeline_mode = #tpu.pipeline_mode<synchronous>, transform_indices = @transform_3, window_bounds = array<i64: 128, 2048>}, {pipeline_mode = #tpu.pipeline_mode<synchronous>, transform_indices = @transform_4, window_bounds = array<i64: 1, 2048>}, {transform_indices = @transform_5, window_bounds = array<i64: 8, 2048>}]} {
    %c0_i32 = arith.constant 0 : i32
    %0 = arith.cmpi eq, %arg1, %c0_i32 : i32
    %1 = arith.extui %0 : i1 to i32
    %c0_i32_0 = arith.constant 0 : i32
    %2 = arith.cmpi ne, %1, %c0_i32_0 : i32
    scf.if %2 {
      %c0_8 = arith.constant 0 : index
      %c0_9 = arith.constant 0 : index
      %10 = vector.load %arg2[%c0_8, %c0_9] : memref<8x128xf32, #tpu.memory_space<vmem>>, vector<8x128xf32>
      %cst_10 = arith.constant dense<0.000000e+00> : vector<8xf32>
      %11 = vector.multi_reduction <add>, %10, %cst_10 [1] : vector<8x128xf32> to vector<8xf32>
      %12 = vector.shape_cast %11 : vector<8xf32> to vector<8x1xf32>
      %cst_11 = arith.constant 1.280000e+02 : f32
      %13 = vector.broadcast %cst_11 : f32 to vector<8x1xf32>
      %14 = arith.divf %12, %13 : vector<8x1xf32>
      %15 = vector.broadcast %14 : vector<8x1xf32> to vector<8x128xf32>
      %16 = arith.subf %10, %15 : vector<8x128xf32>
      %17 = arith.mulf %16, %16 : vector<8x128xf32>
      %cst_12 = arith.constant dense<0.000000e+00> : vector<8xf32>
      %18 = vector.multi_reduction <add>, %17, %cst_12 [1] : vector<8x128xf32> to vector<8xf32>
      %19 = vector.shape_cast %18 : vector<8xf32> to vector<8x1xf32>
      %cst_13 = arith.constant 1.280000e+02 : f32
      %20 = vector.broadcast %cst_13 : f32 to vector<8x1xf32>
      %21 = arith.divf %19, %20 : vector<8x1xf32>
      %cst_14 = arith.constant 1.000000e-07 : f32
      %22 = vector.broadcast %cst_14 : f32 to vector<8x1xf32>
      %23 = arith.addf %21, %22 : vector<8x1xf32>
      %24 = math.rsqrt %23 : vector<8x1xf32>
      %25 = vector.broadcast %24 : vector<8x1xf32> to vector<8x128xf32>
      %26 = arith.mulf %16, %25 : vector<8x128xf32>
      %27 = arith.truncf %26 : vector<8x128xf32> to vector<8x128xbf16>
      %c0_15 = arith.constant 0 : index
      %c0_16 = arith.constant 0 : index
      %28 = vector.load %arg3[%c0_15, %c0_16] : memref<128x128xbf16, #tpu.memory_space<vmem>>, vector<128x128xbf16>
      %cst_17 = arith.constant dense<0.000000e+00> : vector<8x128xf32>
      %29 = tpu.matmul %27, %28, %cst_17 {dimension_numbers = #tpu.dot_dimension_numbers<[1], [0], [0], [1], [0, 0, 1, 1], [], []>} : vector<8x128xbf16>, vector<128x128xbf16>, vector<8x128xf32> -> vector<8x128xf32>
      %c0_18 = arith.constant 0 : index
      %c0_19 = arith.constant 0 : index
      %30 = vector.load %arg4[%c0_18, %c0_19] : memref<1x128xf32, #tpu.memory_space<vmem>>, vector<1x128xf32>
      %31 = vector.broadcast %30 : vector<1x128xf32> to vector<8x128xf32>
      %32 = arith.addf %29, %31 : vector<8x128xf32>
      %cst_20 = arith.constant 5.000000e-01 : f32
      %33 = vector.broadcast %cst_20 : f32 to vector<8x128xf32>
      %34 = arith.mulf %33, %32 : vector<8x128xf32>
      %cst_21 = arith.constant 0.707106769 : f32
      %35 = vector.broadcast %cst_21 : f32 to vector<8x128xf32>
      %36 = arith.mulf %32, %35 : vector<8x128xf32>
      %37 = math.erf %36 : vector<8x128xf32>
      %cst_22 = arith.constant 1.000000e+00 : f32
      %38 = vector.broadcast %cst_22 : f32 to vector<8x128xf32>
      %39 = arith.addf %38, %37 : vector<8x128xf32>
      %40 = arith.mulf %34, %39 : vector<8x128xf32>
      %cst_23 = arith.constant dense<0.000000e+00> : vector<8xf32>
      %41 = vector.multi_reduction <add>, %40, %cst_23 [1] : vector<8x128xf32> to vector<8xf32>
      %42 = vector.shape_cast %41 : vector<8xf32> to vector<8x1xf32>
      %cst_24 = arith.constant 1.280000e+02 : f32
      %43 = vector.broadcast %cst_24 : f32 to vector<8x1xf32>
      %44 = arith.divf %42, %43 : vector<8x1xf32>
      %45 = vector.broadcast %44 : vector<8x1xf32> to vector<8x128xf32>
      %46 = arith.subf %40, %45 : vector<8x128xf32>
      %47 = arith.mulf %46, %46 : vector<8x128xf32>
      %cst_25 = arith.constant dense<0.000000e+00> : vector<8xf32>
      %48 = vector.multi_reduction <add>, %47, %cst_25 [1] : vector<8x128xf32> to vector<8xf32>
      %49 = vector.shape_cast %48 : vector<8xf32> to vector<8x1xf32>
      %cst_26 = arith.constant 1.280000e+02 : f32
      %50 = vector.broadcast %cst_26 : f32 to vector<8x1xf32>
      %51 = arith.divf %49, %50 : vector<8x1xf32>
      %cst_27 = arith.constant 1.000000e-07 : f32
      %52 = vector.broadcast %cst_27 : f32 to vector<8x1xf32>
      %53 = arith.addf %51, %52 : vector<8x1xf32>
      %54 = math.rsqrt %53 : vector<8x1xf32>
      %55 = vector.broadcast %54 : vector<8x1xf32> to vector<8x128xf32>
      %56 = arith.mulf %46, %55 : vector<8x128xf32>
      %57 = arith.truncf %56 : vector<8x128xf32> to vector<8x128xbf16>
      %c0_28 = arith.constant 0 : index
      %c0_29 = arith.constant 0 : index
      %58 = vector.load %arg8[%c0_28, %c0_29] : memref<8x128xbf16, #tpu.memory_space<vmem>>, vector<8x128xbf16>
      tpu.vector_store %arg8[%c0_28, %c0_29], %57 {strides = array<i32>} : memref<8x128xbf16, #tpu.memory_space<vmem>>, vector<8x128xbf16>,
    } else {
    }
    %c0 = arith.constant 0 : index
    %c0_1 = arith.constant 0 : index
    %3 = vector.load %arg8[%c0, %c0_1] : memref<8x128xbf16, #tpu.memory_space<vmem>>, vector<8x128xbf16>
    %c0_2 = arith.constant 0 : index
    %c0_3 = arith.constant 0 : index
    %4 = vector.load %arg5[%c0_2, %c0_3] : memref<128x2048xbf16, #tpu.memory_space<vmem>>, vector<128x2048xbf16>
    %cst = arith.constant dense<0.000000e+00> : vector<8x2048xf32>
    %5 = tpu.matmul %3, %4, %cst {dimension_numbers = #tpu.dot_dimension_numbers<[1], [0], [0], [1], [0, 0, 1, 1], [], []>} : vector<8x128xbf16>, vector<128x2048xbf16>, vector<8x2048xf32> -> vector<8x2048xf32>
    %c0_4 = arith.constant 0 : index
    %c0_5 = arith.constant 0 : index
    %6 = vector.load %arg6[%c0_4, %c0_5] : memref<1x2048xf32, #tpu.memory_space<vmem>>, vector<1x2048xf32>
    %7 = vector.broadcast %6 : vector<1x2048xf32> to vector<8x2048xf32>
    %8 = arith.addf %5, %7 : vector<8x2048xf32>
    %c0_6 = arith.constant 0 : index
    %c0_7 = arith.constant 0 : index
    %9 = vector.load %arg7[%c0_6, %c0_7] : memref<8x2048xf32, #tpu.memory_space<vmem>>, vector<8x2048xf32>
    tpu.vector_store %arg7[%c0_6, %c0_7], %8 {strides = array<i32>} : memref<8x2048xf32, #tpu.memory_space<vmem>>, vector<8x2048xf32>,
    return
  }
  func.func @transform_0(%arg0: i32, %arg1: i32) -> (i32, i32) {
    %c0_i32 = arith.constant 0 : i32
    %c0_i32_0 = arith.constant 0 : i32
    return %arg0, %c0_i32 : i32, i32
  }
  func.func @transform_1(%arg0: i32, %arg1: i32) -> (i32, i32) {
    %c0_i32 = arith.constant 0 : i32
    %c0_i32_0 = arith.constant 0 : i32
    %c0_i32_1 = arith.constant 0 : i32
    return %c0_i32, %c0_i32_0 : i32, i32
  }
  func.func @transform_2(%arg0: i32, %arg1: i32) -> (i32, i32) {
    %c0_i32 = arith.constant 0 : i32
    %c0_i32_0 = arith.constant 0 : i32
    %c0_i32_1 = arith.constant 0 : i32
    return %c0_i32, %c0_i32_0 : i32, i32
  }
  func.func @transform_3(%arg0: i32, %arg1: i32) -> (i32, i32) {
    %c0_i32 = arith.constant 0 : i32
    %c0_i32_0 = arith.constant 0 : i32
    return %c0_i32, %arg1 : i32, i32
  }
  func.func @transform_4(%arg0: i32, %arg1: i32) -> (i32, i32) {
    %c0_i32 = arith.constant 0 : i32
    %c0_i32_0 = arith.constant 0 : i32
    return %c0_i32, %arg1 : i32, i32
  }
  func.func @transform_5(%arg0: i32, %arg1: i32) -> (i32, i32) {
    %c0_i32 = arith.constant 0 : i32
    return %arg0, %arg1 : i32, i32
  }
}

</mosaic_0001>

<llo_original>
// kernel: tpu_custom_call.1
$region0: #{tpu_custom_call.1}
  #allocation0 [shape = 'u32[]', space=smem, size = 0x4, offset = 0x4, fixed_abs, tag = 'smem constant byte address 0x4 - core index']
  #allocation1 [shape = 'u32[144,128]{1,0:T(1,128)}', space=vmem, size = 0x12000, scoped, tag = 'internal scratch']
  #allocation2 [shape = 'bf16[8,128]{1,0:T(8,128)(2,1)}', space=vmem, size = 0x800, scoped, tag = 'scratch operand']
  %s0 = inlined_call_operand.hbm [shape: f32[8,128], index: 0, kind: input, shape index: {}]
  %s1 = inlined_call_operand.hbm [shape: bf16[128,128], index: 1, kind: input, shape index: {}]
  %s2 = inlined_call_operand.vmem [shape: f32[1,128], index: 2, kind: input, shape index: {}]
  %s3 = inlined_call_operand.hbm [shape: bf16[128,2048], index: 3, kind: input, shape index: {}]
  %s4 = inlined_call_operand.hbm [shape: f32[1,2048], index: 4, kind: input, shape index: {}]
  %s5 = inlined_call_operand.hbm [shape: f32[8,2048], index: 5, kind: output, shape index: {}]
  %s6 = sld [smem:[#allocation0]]
  $region50: #{tpu_custom_call.1} parent=0
    _
  %s8 = ssub.s32 1, %s6
  %s9 = scalar_select 0, %s8, %s6
  $region1: #{tpu_custom_call.1} parent=0
    #allocation3 [shape = 'u8[4096]{0}', space=vmem, size = 0x1000, scoped, tag = 'input window, operand 0, single buffered']
    #allocation4 [shape = 's32[1]{0}', space=sflag, size = 0x4, scoped, tag = 'scoped memory for tpu_custom_call.1']
    #allocation5 [shape = 's32[1]{0}', space=sflag, size = 0x4, scoped, tag = 'scoped memory for tpu_custom_call.1']
    #allocation6 [shape = 'u8[32768]{0}', space=vmem, size = 0x8000, scoped, tag = 'input window, operand 1, single buffered']
    #allocation7 [shape = 's32[1]{0}', space=sflag, size = 0x4, scoped, tag = 'scoped memory for tpu_custom_call.1']
    #allocation8 [shape = 'u8[524288]{0}', space=vmem, size = 0x80000, scoped, tag = 'input window, operand 3, single buffered']
    #allocation9 [shape = 'u8[8192]{0}', space=vmem, size = 0x2000, scoped, tag = 'input window, operand 4, single buffered']
    #allocation10 [shape = 's32[1]{0}', space=sflag, size = 0x4, scoped, tag = 'scoped memory for tpu_custom_call.1']
    #allocation11 [shape = 'u8[65536]{0}', space=vmem, size = 0x10000, scoped, tag = 'output window, operand 0, single buffered']
    %10 = vsyncpa [#allocation4], 0
    %11 = vsyncpa [#allocation7], 0
    %12 = vsyncpa [#allocation10], 0
    %13 = vsyncpa [#allocation5], 0
    // Predicated region
    $region2: #{tpu_custom_call.1} parent=1 // pred_check
      _
    $region3: #{tpu_custom_call.1} parent=1 // pred_check_branch
      %15 = sbr.rel (0) target = $region5
    $region4: #{tpu_custom_call.1} parent=1 // pred_region
      %s17 = ssub.s32 128, 128
      %18 = vsyncadd [#allocation4], %s17
      %s20 = sshll.u32 [#allocation3], 4
      %s21 = int_to_ptr.vmem [resolvable:$true] %s20
      %23 = dma.hbm_to_vmem [thread:$0]  %s0, 128, %s21, [#allocation4]
    $region5: #{tpu_custom_call.1} parent=1 // pred_fallthru
      _
    // Predicated region
    $region6: #{tpu_custom_call.1} parent=1 // pred_check
      _
    $region7: #{tpu_custom_call.1} parent=1 // pred_check_branch
      %25 = sbr.rel (0) target = $region9
    $region8: #{tpu_custom_call.1} parent=1 // pred_region
      %s27 = ssub.s32 1024, 1024
      %28 = vsyncadd [#allocation7], %s27
      %s29 = sshll.u32 [#allocation6], 4
      %s30 = int_to_ptr.vmem [resolvable:$true] %s29
      %35 = dma.hbm_to_vmem [thread:$0]  %s1, 1024, %s30, [#allocation7], 64, 64, 4
    $region9: #{tpu_custom_call.1} parent=1 // pred_fallthru
      _
    // Predicated region
    $region10: #{tpu_custom_call.1} parent=1 // pred_check
      _
    $region11: #{tpu_custom_call.1} parent=1 // pred_check_branch
      %37 = sbr.rel (0) target = $region13
    $region12: #{tpu_custom_call.1} parent=1 // pred_region
      _
    $region13: #{tpu_custom_call.1} parent=1 // pred_fallthru
      _
    // Predicated region
    $region14: #{tpu_custom_call.1} parent=1 // pred_check
      _
    $region15: #{tpu_custom_call.1} parent=1 // pred_check_branch
      %39 = sbr.rel (0) target = $region17
    $region16: #{tpu_custom_call.1} parent=1 // pred_region
      %s41 = ssub.s32 16384, 16384
      %42 = vsyncadd [#allocation7], %s41
      %s43 = sshll.u32 [#allocation8], 4
      %s44 = int_to_ptr.vmem [resolvable:$true] %s43
      %49 = dma.hbm_to_vmem [thread:$0]  %s3, 16384, %s44, [#allocation7], 1024, 1024, 64
    $region17: #{tpu_custom_call.1} parent=1 // pred_fallthru
      _
    // Predicated region
    $region18: #{tpu_custom_call.1} parent=1 // pred_check
      _
    $region19: #{tpu_custom_call.1} parent=1 // pred_check_branch
      %51 = sbr.rel (0) target = $region21
    $region20: #{tpu_custom_call.1} parent=1 // pred_region
      %s53 = ssub.s32 256, 256
      %54 = vsyncadd [#allocation10], %s53
      %s56 = sshll.u32 [#allocation9], 4
      %s57 = int_to_ptr.vmem [resolvable:$true] %s56
      %59 = dma.hbm_to_vmem [thread:$0]  %s4, 256, %s57, [#allocation10]
    $region21: #{tpu_custom_call.1} parent=1 // pred_fallthru
      _
    // Predicated region
    $region22: #{tpu_custom_call.1} parent=1 // pred_check
      _
    $region23: #{tpu_custom_call.1} parent=1 // pred_check_branch
      %61 = sbr.rel (0) target = $region25
    $region24: #{tpu_custom_call.1} parent=1 // pred_region
      %62 = dma.done [#allocation4], 128
    $region25: #{tpu_custom_call.1} parent=1 // pred_fallthru
      _
    // Predicated region
    $region26: #{tpu_custom_call.1} parent=1 // pred_check
      _
    $region27: #{tpu_custom_call.1} parent=1 // pred_check_branch
      %64 = sbr.rel (0) target = $region29
    $region28: #{tpu_custom_call.1} parent=1 // pred_region
      %65 = dma.done [#allocation7], 1024
    $region29: #{tpu_custom_call.1} parent=1 // pred_fallthru
      _
    // Predicated region
    $region30: #{tpu_custom_call.1} parent=1 // pred_check
      _
    $region31: #{tpu_custom_call.1} parent=1 // pred_check_branch
      %67 = sbr.rel (0) target = $region33
    $region32: #{tpu_custom_call.1} parent=1 // pred_region
      %68 = dma.done [#allocation7], 16384
    $region33: #{tpu_custom_call.1} parent=1 // pred_fallthru
      _
    // Predicated region
    $region34: #{tpu_custom_call.1} parent=1 // pred_check
      _
    $region35: #{tpu_custom_call.1} parent=1 // pred_check_branch
      %70 = sbr.rel (0) target = $region37
    $region36: #{tpu_custom_call.1} parent=1 // pred_region
      %71 = dma.done [#allocation10], 256
    $region37: #{tpu_custom_call.1} parent=1 // pred_fallthru
      _
    %p73 = scmp.eq.s32.totalorder 0, 0
    // Predicated region
    $region38: #{tpu_custom_call.1} parent=1 // pred_check
      %p74 = pneg %p73
    $region39: #{tpu_custom_call.1} parent=1 // pred_check_branch
      %76 = sbr.rel (%p74) target = $region41
    $region40: #{tpu_custom_call.1} parent=1 // pred_region
      %v77 = vld [vmem:[#allocation3] sm:$0xff]
      %78 = vadd.xlane.f32.xlu0 %v77
      %v79 = vpop.xlane.xlu0 %78
      %v80 = vrcp.pop 128.0
      %v81 = vmul.f32 %v79, %v80
      %v82 = vsub.f32 %v77, %v81
      %v83 = vmul.f32 %v82, %v82
      %84 = vadd.xlane.f32.xlu0 %v83
      %v85 = vpop.xlane.xlu0 %84
      %v86 = vmul.f32 %v85, %v80
      %v87 = vadd.f32 %v86, 1e-07
      %v88 = vrsqrt.pop %v87
      %v89 = vmul.f32 %v82, %v88
      %v90 = vpack.c.bf16 %v89, %v89
      %v91 = vld [vmem:[#allocation6] sm:$0xf]
      %v92 = vld [vmem:[#allocation6 + $0x4] sm:$0xf]
      %v93 = vld [vmem:[#allocation6 + $0x8] sm:$0xf]
      %v94 = vld [vmem:[#allocation6 + $0xc] sm:$0xf]
      %v95 = vld [vmem:[#allocation6 + $0x10] sm:$0xf]
      %v96 = vld [vmem:[#allocation6 + $0x14] sm:$0xf]
      %v97 = vld [vmem:[#allocation6 + $0x18] sm:$0xf]
      %v98 = vld [vmem:[#allocation6 + $0x1c] sm:$0xf]
      %v99 = vld [vmem:[#allocation6 + $0x20] sm:$0xf]
      %v100 = vld [vmem:[#allocation6 + $0x24] sm:$0xf]
      %v101 = vld [vmem:[#allocation6 + $0x28] sm:$0xf]
      %v102 = vld [vmem:[#allocation6 + $0x2c] sm:$0xf]
      %v103 = vld [vmem:[#allocation6 + $0x30] sm:$0xf]
      %v104 = vld [vmem:[#allocation6 + $0x34] sm:$0xf]
      %v105 = vld [vmem:[#allocation6 + $0x38] sm:$0xf]
      %v106 = vld [vmem:[#allocation6 + $0x3c] sm:$0xf]
      %v107 = vld [vmem:[%s2] sm:$0x1]
      %v109 = vlaneseq
      %v110 = vshrl.u32 %v109, 7
      %v111 = vsub.s32 0, %v110
      %v112 = vrot.slane %v107, %v111
      %v130 = vunpack.c.l.b16 %v91
      %v131 = vunpack.c.l.b16 %v92
      %v132 = vunpack.c.l.b16 %v93
      %v133 = vunpack.c.l.b16 %v94
      %v134 = vunpack.c.l.b16 %v95
      %v135 = vunpack.c.l.b16 %v96
      %v136 = vunpack.c.l.b16 %v97
      %v137 = vunpack.c.l.b16 %v98
      %v138 = vunpack.c.l.b16 %v99
      %v139 = vunpack.c.l.b16 %v100
      %v140 = vunpack.c.l.b16 %v101
      %v141 = vunpack.c.l.b16 %v102
      %v142 = vunpack.c.l.b16 %v103
      %v143 = vunpack.c.l.b16 %v104
      %v144 = vunpack.c.l.b16 %v105
      %v145 = vunpack.c.l.b16 %v106
      %v146 = vpack.c.b16 %v131, %v130
      %v147 = vpack.c.b16 %v133, %v132
      %v148 = vpack.c.b16 %v135, %v134
      %v149 = vpack.c.b16 %v137, %v136
      %v150 = vpack.c.b16 %v139, %v138
      %v151 = vpack.c.b16 %v141, %v140
      %v152 = vpack.c.b16 %v143, %v142
      %v153 = vpack.c.b16 %v145, %v144
      %162 = vmatprep.subr.bf16.mxu0 0
      %163 = vmatpush1.bf16.msra.mxu0 %v146
      %164 = vmatprep.subr.bf16.mxu0 0
      %165 = vmatpush1.bf16.msra.mxu0 %v147
      %166 = vmatprep.subr.bf16.mxu0 0
      %167 = vmatpush1.bf16.msra.mxu0 %v148
      %168 = vmatprep.subr.bf16.mxu0 0
      %169 = vmatpush1.bf16.msra.mxu0 %v149
      %170 = vmatprep.subr.bf16.mxu0 0
      %171 = vmatpush1.bf16.msra.mxu0 %v150
      %172 = vmatprep.subr.bf16.mxu0 0
      %173 = vmatpush1.bf16.msra.mxu0 %v151
      %174 = vmatprep.subr.bf16.mxu0 0
      %175 = vmatpush1.bf16.msra.mxu0 %v152
      %176 = vmatprep.subr.bf16.mxu0 0
      %177 = vmatpush1.bf16.msra.mxu0 %v153
      %178 = vmatprep.subr.bf16.mxu0 0
      %179 = vmatpush1.bf16.msra.mxu0 0
      %180 = vmatprep.subr.bf16.mxu0 0
      %181 = vmatpush1.bf16.msra.mxu0 0
      %182 = vmatprep.subr.bf16.mxu0 0
      %183 = vmatpush1.bf16.msra.mxu0 0
      %184 = vmatprep.subr.bf16.mxu0 0
      %185 = vmatpush1.bf16.msra.mxu0 0
      %186 = vmatprep.subr.bf16.mxu0 0
      %187 = vmatpush1.bf16.msra.mxu0 0
      %188 = vmatprep.subr.bf16.mxu0 0
      %189 = vmatpush1.bf16.msra.mxu0 0
      %190 = vmatprep.subr.bf16.mxu0 0
      %191 = vmatpush1.bf16.msra.mxu0 0
      %192 = vmatprep.subr.bf16.mxu0 0
      %193 = vmatpush1.bf16.msra.mxu0 0
      %194 = vmatprep.mubr.bf16.mxu0 0
      %195 = vmatmul.mubr.bf16.gmra.mrb[0].mxu0 %v90
      %v196 = vpop.f32.mrb[0].mxu0
      %v197 = vadd.f32 %v112, %v196
      %v198 = vpop.f32.mrb[0].mxu0
      %v199 = vpop.f32.mrb[0].mxu0
      %v200 = vpop.f32.mrb[0].mxu0
      %201 = vdwg.mxu0
      %v202 = vmul.f32 %v197, 0.5
      %v203 = vmul.f32 %v197, 0.70710677
      %v204 = verf.f32.pop %v203
      %v205 = vadd.f32 %v204, 1.0
      %v206 = vmul.f32 %v202, %v205
      %207 = vadd.xlane.f32.xlu0 %v206
      %v208 = vpop.xlane.xlu0 %207
      %v209 = vmul.f32 %v208, %v80
      %v210 = vsub.f32 %v206, %v209
      %v211 = vmul.f32 %v210, %v210
      %212 = vadd.xlane.f32.xlu0 %v211
      %v213 = vpop.xlane.xlu0 %212
      %v214 = vmul.f32 %v213, %v80
      %v215 = vadd.f32 %v214, 1e-07
      %v216 = vrsqrt.pop %v215
      %v217 = vmul.f32 %v210, %v216
      %v218 = vpack.c.bf16 %v217, %v217
      %219 = vst [vmem:[#allocation2] sm:$0xf] %v218
    $region41: #{tpu_custom_call.1} parent=1 // pred_fallthru
      _
    %v220 = vld [vmem:[#allocation2] sm:$0xf]
    %v221 = vld [vmem:[#allocation8] sm:$0xff]
    %v222 = vld [vmem:[#allocation8 + $0x8] sm:$0xff]
    %v223 = vld [vmem:[#allocation8 + $0x10] sm:$0xff]
    %v224 = vld [vmem:[#allocation8 + $0x18] sm:$0xff]
    %v225 = vld [vmem:[#allocation8 + $0x20] sm:$0xff]
    %v226 = vld [vmem:[#allocation8 + $0x28] sm:$0xff]
    %v227 = vld [vmem:[#allocation8 + $0x30] sm:$0xff]
    %v228 = vld [vmem:[#allocation8 + $0x38] sm:$0xff]
    %v229 = vld [vmem:[#allocation8 + $0x40] sm:$0xff]
    %v230 = vld [vmem:[#allocation8 + $0x48] sm:$0xff]
    %v231 = vld [vmem:[#allocation8 + $0x50] sm:$0xff]
    %v232 = vld [vmem:[#allocation8 + $0x58] sm:$0xff]
    %v233 = vld [vmem:[#allocation8 + $0x60] sm:$0xff]
    %v234 = vld [vmem:[#allocation8 + $0x68] sm:$0xff]
    %v235 = vld [vmem:[#allocation8 + $0x70] sm:$0xff]
    %v236 = vld [vmem:[#allocation8 + $0x78] sm:$0xff]
    %v237 = vld [vmem:[#allocation8 + $0x80] sm:$0xff]
    %v238 = vld [vmem:[#allocation8 + $0x88] sm:$0xff]
    %v239 = vld [vmem:[#allocation8 + $0x90] sm:$0xff]
    %v240 = vld [vmem:[#allocation8 + $0x98] sm:$0xff]
    %v241 = vld [vmem:[#allocation8 + $0xa0] sm:$0xff]
    %v242 = vld [vmem:[#allocation8 + $0xa8] sm:$0xff]
    %v243 = vld [vmem:[#allocation8 + $0xb0] sm:$0xff]
    %v244 = vld [vmem:[#allocation8 + $0xb8] sm:$0xff]
    %v245 = vld [vmem:[#allocation8 + $0xc0] sm:$0xff]
    %v246 = vld [vmem:[#allocation8 + $0xc8] sm:$0xff]
    %v247 = vld [vmem:[#allocation8 + $0xd0] sm:$0xff]
    %v248 = vld [vmem:[#allocation8 + $0xd8] sm:$0xff]
    %v249 = vld [vmem:[#allocation8 + $0xe0] sm:$0xff]
    %v250 = vld [vmem:[#allocation8 + $0xe8] sm:$0xff]
    %v251 = vld [vmem:[#allocation8 + $0xf0] sm:$0xff]
    %v252 = vld [vmem:[#allocation8 + $0xf8] sm:$0xff]
    %v253 = vld [vmem:[#allocation8 + $0x100] sm:$0xff]
    %v254 = vld [vmem:[#allocation8 + $0x108] sm:$0xff]
    %v255 = vld [vmem:[#allocation8 + $0x110] sm:$0xff]
    %v256 = vld [vmem:[#allocation8 + $0x118] sm:$0xff]
    %v257 = vld [vmem:[#allocation8 + $0x120] sm:$0xff]
    %v258 = vld [vmem:[#allocation8 + $0x128] sm:$0xff]
    %v259 = vld [vmem:[#allocation8 + $0x130] sm:$0xff]
    %v260 = vld [vmem:[#allocation8 + $0x138] sm:$0xff]
    %v261 = vld [vmem:[#allocation8 + $0x140] sm:$0xff]
    %v262 = vld [vmem:[#allocation8 + $0x148] sm:$0xff]
    %v263 = vld [vmem:[#allocation8 + $0x150] sm:$0xff]
    %v264 = vld [vmem:[#allocation8 + $0x158] sm:$0xff]
    %v265 = vld [vmem:[#allocation8 + $0x160] sm:$0xff]
    %v266 = vld [vmem:[#allocation8 + $0x168] sm:$0xff]
    %v267 = vld [vmem:[#allocation8 + $0x170] sm:$0xff]
    %v268 = vld [vmem:[#allocation8 + $0x178] sm:$0xff]
    %v269 = vld [vmem:[#allocation8 + $0x180] sm:$0xff]
    %v270 = vld [vmem:[#allocation8 + $0x188] sm:$0xff]
    %v271 = vld [vmem:[#allocation8 + $0x190] sm:$0xff]
    %v272 = vld [vmem:[#allocation8 + $0x198] sm:$0xff]
    %v273 = vld [vmem:[#allocation8 + $0x1a0] sm:$0xff]
    %v274 = vld [vmem:[#allocation8 + $0x1a8] sm:$0xff]
    %v275 = vld [vmem:[#allocation8 + $0x1b0] sm:$0xff]
    %v276 = vld [vmem:[#allocation8 + $0x1b8] sm:$0xff]
    %v277 = vld [vmem:[#allocation8 + $0x1c0] sm:$0xff]
    %v278 = vld [vmem:[#allocation8 + $0x1c8] sm:$0xff]
    %v279 = vld [vmem:[#allocation8 + $0x1d0] sm:$0xff]
    %v280 = vld [vmem:[#allocation8 + $0x1d8] sm:$0xff]
    %v281 = vld [vmem:[#allocation8 + $0x1e0] sm:$0xff]
    %v282 = vld [vmem:[#allocation8 + $0x1e8] sm:$0xff]
    %v283 = vld [vmem:[#allocation8 + $0x1f0] sm:$0xff]
    %v284 = vld [vmem:[#allocation8 + $0x1f8] sm:$0xff]
    %v285 = vld [vmem:[#allocation8 + $0x200] sm:$0xff]
    %v286 = vld [vmem:[#allocation8 + $0x208] sm:$0xff]
    %v287 = vld [vmem:[#allocation8 + $0x210] sm:$0xff]
    %v288 = vld [vmem:[#allocation8 + $0x218] sm:$0xff]
    %v289 = vld [vmem:[#allocation8 + $0x220] sm:$0xff]
    %v290 = vld [vmem:[#allocation8 + $0x228] sm:$0xff]
    %v291 = vld [vmem:[#allocation8 + $0x230] sm:$0xff]
    %v292 = vld [vmem:[#allocation8 + $0x238] sm:$0xff]
    %v293 = vld [vmem:[#allocation8 + $0x240] sm:$0xff]
    %v294 = vld [vmem:[#allocation8 + $0x248] sm:$0xff]
    %v295 = vld [vmem:[#allocation8 + $0x250] sm:$0xff]
    %v296 = vld [vmem:[#allocation8 + $0x258] sm:$0xff]
    %v297 = vld [vmem:[#allocation8 + $0x260] sm:$0xff]
    %v298 = vld [vmem:[#allocation8 + $0x268] sm:$0xff]
    %v299 = vld [vmem:[#allocation8 + $0x270] sm:$0xff]
    %v300 = vld [vmem:[#allocation8 + $0x278] sm:$0xff]
    %v301 = vld [vmem:[#allocation8 + $0x280] sm:$0xff]
    %v302 = vld [vmem:[#allocation8 + $0x288] sm:$0xff]
    %v303 = vld [vmem:[#allocation8 + $0x290] sm:$0xff]
    %v304 = vld [vmem:[#allocation8 + $0x298] sm:$0xff]
    %v305 = vld [vmem:[#allocation8 + $0x2a0] sm:$0xff]
    %v306 = vld [vmem:[#allocation8 + $0x2a8] sm:$0xff]
    %v307 = vld [vmem:[#allocation8 + $0x2b0] sm:$0xff]
    %v308 = vld [vmem:[#allocation8 + $0x2b8] sm:$0xff]
    %v309 = vld [vmem:[#allocation8 + $0x2c0] sm:$0xff]
    %v310 = vld [vmem:[#allocation8 + $0x2c8] sm:$0xff]
    %v311 = vld [vmem:[#allocation8 + $0x2d0] sm:$0xff]
    %v312 = vld [vmem:[#allocation8 + $0x2d8] sm:$0xff]
    %v313 = vld [vmem:[#allocation8 + $0x2e0] sm:$0xff]
    %v314 = vld [vmem:[#allocation8 + $0x2e8] sm:$0xff]
    %v315 = vld [vmem:[#allocation8 + $0x2f0] sm:$0xff]
    %v316 = vld [vmem:[#allocation8 + $0x2f8] sm:$0xff]
    %v317 = vld [vmem:[#allocation8 + $0x300] sm:$0xff]
    %v318 = vld [vmem:[#allocation8 + $0x308] sm:$0xff]
    %v319 = vld [vmem:[#allocation8 + $0x310] sm:$0xff]
    %v320 = vld [vmem:[#allocation8 + $0x318] sm:$0xff]
    %v321 = vld [vmem:[#allocation8 + $0x320] sm:$0xff]
    %v322 = vld [vmem:[#allocation8 + $0x328] sm:$0xff]
    %v323 = vld [vmem:[#allocation8 + $0x330] sm:$0xff]
    %v324 = vld [vmem:[#allocation8 + $0x338] sm:$0xff]
    %v325 = vld [vmem:[#allocation8 + $0x340] sm:$0xff]
    %v326 = vld [vmem:[#allocation8 + $0x348] sm:$0xff]
    %v327 = vld [vmem:[#allocation8 + $0x350] sm:$0xff]
    %v328 = vld [vmem:[#allocation8 + $0x358] sm:$0xff]
    %v329 = vld [vmem:[#allocation8 + $0x360] sm:$0xff]
    %v330 = vld [vmem:[#allocation8 + $0x368] sm:$0xff]
    %v331 = vld [vmem:[#allocation8 + $0x370] sm:$0xff]
    %v332 = vld [vmem:[#allocation8 + $0x378] sm:$0xff]
    %v333 = vld [vmem:[#allocation8 + $0x380] sm:$0xff]
    %v334 = vld [vmem:[#allocation8 + $0x388] sm:$0xff]
    %v335 = vld [vmem:[#allocation8 + $0x390] sm:$0xff]
    %v336 = vld [vmem:[#allocation8 + $0x398] sm:$0xff]
    %v337 = vld [vmem:[#allocation8 + $0x3a0] sm:$0xff]
    %v338 = vld [vmem:[#allocation8 + $0x3a8] sm:$0xff]
    %v339 = vld [vmem:[#allocation8 + $0x3b0] sm:$0xff]
    %v340 = vld [vmem:[#allocation8 + $0x3b8] sm:$0xff]
    %v341 = vld [vmem:[#allocation8 + $0x3c0] sm:$0xff]
    %v342 = vld [vmem:[#allocation8 + $0x3c8] sm:$0xff]
    %v343 = vld [vmem:[#allocation8 + $0x3d0] sm:$0xff]
    %v344 = vld [vmem:[#allocation8 + $0x3d8] sm:$0xff]
    %v345 = vld [vmem:[#allocation8 + $0x3e0] sm:$0xff]
    %v346 = vld [vmem:[#allocation8 + $0x3e8] sm:$0xff]
    %v347 = vld [vmem:[#allocation8 + $0x3f0] sm:$0xff]
    %v348 = vld [vmem:[#allocation8 + $0x3f8] sm:$0xff]
    %v349 = vld [vmem:[#allocation9] sm:$0xff]
    %v350 = vld [vmem:[#allocation9 + $0x8] sm:$0xff]
    %v353 = vlaneseq
    %v354 = vshrl.u32 %v353, 7
    %v355 = vsub.s32 0, %v354
    %v356 = vrot.slane %v349, %v355
    %v357 = vlaneseq
    %v358 = vshrl.u32 %v357, 7
    %v359 = vsub.s32 1, %v358
    %v360 = vrot.slane %v349, %v359
    %v361 = vlaneseq
    %v362 = vshrl.u32 %v361, 7
    %v363 = vsub.s32 2, %v362
    %v364 = vrot.slane %v349, %v363
    %v365 = vlaneseq
    %v366 = vshrl.u32 %v365, 7
    %v367 = vsub.s32 3, %v366
    %v368 = vrot.slane %v349, %v367
    %v369 = vlaneseq
    %v370 = vshrl.u32 %v369, 7
    %v371 = vsub.s32 4, %v370
    %v372 = vrot.slane %v349, %v371
    %v373 = vlaneseq
    %v374 = vshrl.u32 %v373, 7
    %v375 = vsub.s32 5, %v374
    %v376 = vrot.slane %v349, %v375
    %v377 = vlaneseq
    %v378 = vshrl.u32 %v377, 7
    %v379 = vsub.s32 6, %v378
    %v380 = vrot.slane %v349, %v379
    %v381 = vlaneseq
    %v382 = vshrl.u32 %v381, 7
    %v383 = vsub.s32 7, %v382
    %v384 = vrot.slane %v349, %v383
    %v385 = vlaneseq
    %v386 = vshrl.u32 %v385, 7
    %v387 = vsub.s32 0, %v386
    %v388 = vrot.slane %v350, %v387
    %v389 = vlaneseq
    %v390 = vshrl.u32 %v389, 7
    %v391 = vsub.s32 1, %v390
    %v392 = vrot.slane %v350, %v391
    %v393 = vlaneseq
    %v394 = vshrl.u32 %v393, 7
    %v395 = vsub.s32 2, %v394
    %v396 = vrot.slane %v350, %v395
    %v397 = vlaneseq
    %v398 = vshrl.u32 %v397, 7
    %v399 = vsub.s32 3, %v398
    %v400 = vrot.slane %v350, %v399
    %v401 = vlaneseq
    %v402 = vshrl.u32 %v401, 7
    %v403 = vsub.s32 4, %v402
    %v404 = vrot.slane %v350, %v403
    %v405 = vlaneseq
    %v406 = vshrl.u32 %v405, 7
    %v407 = vsub.s32 5, %v406
    %v408 = vrot.slane %v350, %v407
    %v409 = vlaneseq
    %v410 = vshrl.u32 %v409, 7
    %v411 = vsub.s32 6, %v410
    %v412 = vrot.slane %v350, %v411
    %v413 = vlaneseq
    %v414 = vshrl.u32 %v413, 7
    %v415 = vsub.s32 7, %v414
    %v416 = vrot.slane %v350, %v415
    %v561 = vunpack.c.l.b16 %v221
    %v562 = vunpack.c.h.b16 %v221
    %v563 = vunpack.c.l.b16 %v222
    %v564 = vunpack.c.h.b16 %v222
    %v565 = vunpack.c.l.b16 %v223
    %v566 = vunpack.c.h.b16 %v223
    %v567 = vunpack.c.l.b16 %v224
    %v568 = vunpack.c.h.b16 %v224
    %v569 = vunpack.c.l.b16 %v225
    %v570 = vunpack.c.h.b16 %v225
    %v571 = vunpack.c.l.b16 %v226
    %v572 = vunpack.c.h.b16 %v226
    %v573 = vunpack.c.l.b16 %v227
    %v574 = vunpack.c.h.b16 %v227
    %v575 = vunpack.c.l.b16 %v228
    %v576 = vunpack.c.h.b16 %v228
    %v577 = vunpack.c.l.b16 %v229
    %v578 = vunpack.c.h.b16 %v229
    %v579 = vunpack.c.l.b16 %v230
    %v580 = vunpack.c.h.b16 %v230
    %v581 = vunpack.c.l.b16 %v231
    %v582 = vunpack.c.h.b16 %v231
    %v583 = vunpack.c.l.b16 %v232
    %v584 = vunpack.c.h.b16 %v232
    %v585 = vunpack.c.l.b16 %v233
    %v586 = vunpack.c.h.b16 %v233
    %v587 = vunpack.c.l.b16 %v234
    %v588 = vunpack.c.h.b16 %v234
    %v589 = vunpack.c.l.b16 %v235
    %v590 = vunpack.c.h.b16 %v235
    %v591 = vunpack.c.l.b16 %v236
    %v592 = vunpack.c.h.b16 %v236
    %v593 = vunpack.c.l.b16 %v237
    %v594 = vunpack.c.h.b16 %v237
    %v595 = vunpack.c.l.b16 %v238
    %v596 = vunpack.c.h.b16 %v238
    %v597 = vunpack.c.l.b16 %v239
    %v598 = vunpack.c.h.b16 %v239
    %v599 = vunpack.c.l.b16 %v240
    %v600 = vunpack.c.h.b16 %v240
    %v601 = vunpack.c.l.b16 %v241
    %v602 = vunpack.c.h.b16 %v241
    %v603 = vunpack.c.l.b16 %v242
    %v604 = vunpack.c.h.b16 %v242
    %v605 = vunpack.c.l.b16 %v243
    %v606 = vunpack.c.h.b16 %v243
    %v607 = vunpack.c.l.b16 %v244
    %v608 = vunpack.c.h.b16 %v244
    %v609 = vunpack.c.l.b16 %v245
    %v610 = vunpack.c.h.b16 %v245
    %v611 = vunpack.c.l.b16 %v246
    %v612 = vunpack.c.h.b16 %v246
    %v613 = vunpack.c.l.b16 %v247
    %v614 = vunpack.c.h.b16 %v247
    %v615 = vunpack.c.l.b16 %v248
    %v616 = vunpack.c.h.b16 %v248
    %v617 = vunpack.c.l.b16 %v249
    %v618 = vunpack.c.h.b16 %v249
    %v619 = vunpack.c.l.b16 %v250
    %v620 = vunpack.c.h.b16 %v250
    %v621 = vunpack.c.l.b16 %v251
    %v622 = vunpack.c.h.b16 %v251
    %v623 = vunpack.c.l.b16 %v252
    %v624 = vunpack.c.h.b16 %v252
    %v625 = vunpack.c.l.b16 %v253
    %v626 = vunpack.c.h.b16 %v253
    %v627 = vunpack.c.l.b16 %v254
    %v628 = vunpack.c.h.b16 %v254
    %v629 = vunpack.c.l.b16 %v255
    %v630 = vunpack.c.h.b16 %v255
    %v631 = vunpack.c.l.b16 %v256
    %v632 = vunpack.c.h.b16 %v256
    %v633 = vunpack.c.l.b16 %v257
    %v634 = vunpack.c.h.b16 %v257
    %v635 = vunpack.c.l.b16 %v258
    %v636 = vunpack.c.h.b16 %v258
    %v637 = vunpack.c.l.b16 %v259
    %v638 = vunpack.c.h.b16 %v259
    %v639 = vunpack.c.l.b16 %v260
    %v640 = vunpack.c.h.b16 %v260
    %v641 = vunpack.c.l.b16 %v261
    %v642 = vunpack.c.h.b16 %v261
    %v643 = vunpack.c.l.b16 %v262
    %v644 = vunpack.c.h.b16 %v262
    %v645 = vunpack.c.l.b16 %v263
    %v646 = vunpack.c.h.b16 %v263
    %v647 = vunpack.c.l.b16 %v264
    %v648 = vunpack.c.h.b16 %v264
    %v649 = vunpack.c.l.b16 %v265
    %v650 = vunpack.c.h.b16 %v265
    %v651 = vunpack.c.l.b16 %v266
    %v652 = vunpack.c.h.b16 %v266
    %v653 = vunpack.c.l.b16 %v267
    %v654 = vunpack.c.h.b16 %v267
    %v655 = vunpack.c.l.b16 %v268
    %v656 = vunpack.c.h.b16 %v268
    %v657 = vunpack.c.l.b16 %v269
    %v658 = vunpack.c.h.b16 %v269
    %v659 = vunpack.c.l.b16 %v270
    %v660 = vunpack.c.h.b16 %v270
    %v661 = vunpack.c.l.b16 %v271
    %v662 = vunpack.c.h.b16 %v271
    %v663 = vunpack.c.l.b16 %v272
    %v664 = vunpack.c.h.b16 %v272
    %v665 = vunpack.c.l.b16 %v273
    %v666 = vunpack.c.h.b16 %v273
    %v667 = vunpack.c.l.b16 %v274
    %v668 = vunpack.c.h.b16 %v274
    %v669 = vunpack.c.l.b16 %v275
    %v670 = vunpack.c.h.b16 %v275
    %v671 = vunpack.c.l.b16 %v276
    %v672 = vunpack.c.h.b16 %v276
    %v673 = vunpack.c.l.b16 %v277
    %v674 = vunpack.c.h.b16 %v277
    %v675 = vunpack.c.l.b16 %v278
    %v676 = vunpack.c.h.b16 %v278
    %v677 = vunpack.c.l.b16 %v279
    %v678 = vunpack.c.h.b16 %v279
    %v679 = vunpack.c.l.b16 %v280
    %v680 = vunpack.c.h.b16 %v280
    %v681 = vunpack.c.l.b16 %v281
    %v682 = vunpack.c.h.b16 %v281
    %v683 = vunpack.c.l.b16 %v282
    %v684 = vunpack.c.h.b16 %v282
    %v685 = vunpack.c.l.b16 %v283
    %v686 = vunpack.c.h.b16 %v283
    %v687 = vunpack.c.l.b16 %v284
    %v688 = vunpack.c.h.b16 %v284
    %v689 = vunpack.c.l.b16 %v285
    %v690 = vunpack.c.h.b16 %v285
    %v691 = vunpack.c.l.b16 %v286
    %v692 = vunpack.c.h.b16 %v286
    %v693 = vunpack.c.l.b16 %v287
    %v694 = vunpack.c.h.b16 %v287
    %v695 = vunpack.c.l.b16 %v288
    %v696 = vunpack.c.h.b16 %v288
    %v697 = vunpack.c.l.b16 %v289
    %v698 = vunpack.c.h.b16 %v289
    %v699 = vunpack.c.l.b16 %v290
    %v700 = vunpack.c.h.b16 %v290
    %v701 = vunpack.c.l.b16 %v291
    %v702 = vunpack.c.h.b16 %v291
    %v703 = vunpack.c.l.b16 %v292
    %v704 = vunpack.c.h.b16 %v292
    %v705 = vunpack.c.l.b16 %v293
    %v706 = vunpack.c.h.b16 %v293
    %v707 = vunpack.c.l.b16 %v294
    %v708 = vunpack.c.h.b16 %v294
    %v709 = vunpack.c.l.b16 %v295
    %v710 = vunpack.c.h.b16 %v295
    %v711 = vunpack.c.l.b16 %v296
    %v712 = vunpack.c.h.b16 %v296
    %v713 = vunpack.c.l.b16 %v297
    %v714 = vunpack.c.h.b16 %v297
    %v715 = vunpack.c.l.b16 %v298
    %v716 = vunpack.c.h.b16 %v298
    %v717 = vunpack.c.l.b16 %v299
    %v718 = vunpack.c.h.b16 %v299
    %v719 = vunpack.c.l.b16 %v300
    %v720 = vunpack.c.h.b16 %v300
    %v721 = vunpack.c.l.b16 %v301
    %v722 = vunpack.c.h.b16 %v301
    %v723 = vunpack.c.l.b16 %v302
    %v724 = vunpack.c.h.b16 %v302
    %v725 = vunpack.c.l.b16 %v303
    %v726 = vunpack.c.h.b16 %v303
    %v727 = vunpack.c.l.b16 %v304
    %v728 = vunpack.c.h.b16 %v304
    %v729 = vunpack.c.l.b16 %v305
    %v730 = vunpack.c.h.b16 %v305
    %v731 = vunpack.c.l.b16 %v306
    %v732 = vunpack.c.h.b16 %v306
    %v733 = vunpack.c.l.b16 %v307
    %v734 = vunpack.c.h.b16 %v307
    %v735 = vunpack.c.l.b16 %v308
    %v736 = vunpack.c.h.b16 %v308
    %v737 = vunpack.c.l.b16 %v309
    %v738 = vunpack.c.h.b16 %v309
    %v739 = vunpack.c.l.b16 %v310
    %v740 = vunpack.c.h.b16 %v310
    %v741 = vunpack.c.l.b16 %v311
    %v742 = vunpack.c.h.b16 %v311
    %v743 = vunpack.c.l.b16 %v312
    %v744 = vunpack.c.h.b16 %v312
    %v745 = vunpack.c.l.b16 %v313
    %v746 = vunpack.c.h.b16 %v313
    %v747 = vunpack.c.l.b16 %v314
    %v748 = vunpack.c.h.b16 %v314
    %v749 = vunpack.c.l.b16 %v315
    %v750 = vunpack.c.h.b16 %v315
    %v751 = vunpack.c.l.b16 %v316
    %v752 = vunpack.c.h.b16 %v316
    %v753 = vunpack.c.l.b16 %v317
    %v754 = vunpack.c.h.b16 %v317
    %v755 = vunpack.c.l.b16 %v318
    %v756 = vunpack.c.h.b16 %v318
    %v757 = vunpack.c.l.b16 %v319
    %v758 = vunpack.c.h.b16 %v319
    %v759 = vunpack.c.l.b16 %v320
    %v760 = vunpack.c.h.b16 %v320
    %v761 = vunpack.c.l.b16 %v321
    %v762 = vunpack.c.h.b16 %v321
    %v763 = vunpack.c.l.b16 %v322
    %v764 = vunpack.c.h.b16 %v322
    %v765 = vunpack.c.l.b16 %v323
    %v766 = vunpack.c.h.b16 %v323
    %v767 = vunpack.c.l.b16 %v324
    %v768 = vunpack.c.h.b16 %v324
    %v769 = vunpack.c.l.b16 %v325
    %v770 = vunpack.c.h.b16 %v325
    %v771 = vunpack.c.l.b16 %v326
    %v772 = vunpack.c.h.b16 %v326
    %v773 = vunpack.c.l.b16 %v327
    %v774 = vunpack.c.h.b16 %v327
    %v775 = vunpack.c.l.b16 %v328
    %v776 = vunpack.c.h.b16 %v328
    %v777 = vunpack.c.l.b16 %v329
    %v778 = vunpack.c.h.b16 %v329
    %v779 = vunpack.c.l.b16 %v330
    %v780 = vunpack.c.h.b16 %v330
    %v781 = vunpack.c.l.b16 %v331
    %v782 = vunpack.c.h.b16 %v331
    %v783 = vunpack.c.l.b16 %v332
    %v784 = vunpack.c.h.b16 %v332
    %v785 = vunpack.c.l.b16 %v333
    %v786 = vunpack.c.h.b16 %v333
    %v787 = vunpack.c.l.b16 %v334
    %v788 = vunpack.c.h.b16 %v334
    %v789 = vunpack.c.l.b16 %v335
    %v790 = vunpack.c.h.b16 %v335
    %v791 = vunpack.c.l.b16 %v336
    %v792 = vunpack.c.h.b16 %v336
    %v793 = vunpack.c.l.b16 %v337
    %v794 = vunpack.c.h.b16 %v337
    %v795 = vunpack.c.l.b16 %v338
    %v796 = vunpack.c.h.b16 %v338
    %v797 = vunpack.c.l.b16 %v339
    %v798 = vunpack.c.h.b16 %v339
    %v799 = vunpack.c.l.b16 %v340
    %v800 = vunpack.c.h.b16 %v340
    %v801 = vunpack.c.l.b16 %v341
    %v802 = vunpack.c.h.b16 %v341
    %v803 = vunpack.c.l.b16 %v342
    %v804 = vunpack.c.h.b16 %v342
    %v805 = vunpack.c.l.b16 %v343
    %v806 = vunpack.c.h.b16 %v343
    %v807 = vunpack.c.l.b16 %v344
    %v808 = vunpack.c.h.b16 %v344
    %v809 = vunpack.c.l.b16 %v345
    %v810 = vunpack.c.h.b16 %v345
    %v811 = vunpack.c.l.b16 %v346
    %v812 = vunpack.c.h.b16 %v346
    %v813 = vunpack.c.l.b16 %v347
    %v814 = vunpack.c.h.b16 %v347
    %v815 = vunpack.c.l.b16 %v348
    %v816 = vunpack.c.h.b16 %v348
    %v817 = vpack.c.b16 %v577, %v561
    %v818 = vpack.c.b16 %v578, %v562
    %v819 = vpack.c.b16 %v579, %v563
    %v820 = vpack.c.b16 %v580, %v564
    %v821 = vpack.c.b16 %v581, %v565
    %v822 = vpack.c.b16 %v582, %v566
    %v823 = vpack.c.b16 %v583, %v567
    %v824 = vpack.c.b16 %v584, %v568
    %v825 = vpack.c.b16 %v585, %v569
    %v826 = vpack.c.b16 %v586, %v570
    %v827 = vpack.c.b16 %v587, %v571
    %v828 = vpack.c.b16 %v588, %v572
    %v829 = vpack.c.b16 %v589, %v573
    %v830 = vpack.c.b16 %v590, %v574
    %v831 = vpack.c.b16 %v591, %v575
    %v832 = vpack.c.b16 %v592, %v576
    %v833 = vpack.c.b16 %v609, %v593
    %v834 = vpack.c.b16 %v610, %v594
    %v835 = vpack.c.b16 %v611, %v595
    %v836 = vpack.c.b16 %v612, %v596
    %v837 = vpack.c.b16 %v613, %v597
    %v838 = vpack.c.b16 %v614, %v598
    %v839 = vpack.c.b16 %v615, %v599
    %v840 = vpack.c.b16 %v616, %v600
    %v841 = vpack.c.b16 %v617, %v601
    %v842 = vpack.c.b16 %v618, %v602
    %v843 = vpack.c.b16 %v619, %v603
    %v844 = vpack.c.b16 %v620, %v604
    %v845 = vpack.c.b16 %v621, %v605
    %v846 = vpack.c.b16 %v622, %v606
    %v847 = vpack.c.b16 %v623, %v607
    %v848 = vpack.c.b16 %v624, %v608
    %v849 = vpack.c.b16 %v641, %v625
    %v850 = vpack.c.b16 %v642, %v626
    %v851 = vpack.c.b16 %v643, %v627
    %v852 = vpack.c.b16 %v644, %v628
    %v853 = vpack.c.b16 %v645, %v629
    %v854 = vpack.c.b16 %v646, %v630
    %v855 = vpack.c.b16 %v647, %v631
    %v856 = vpack.c.b16 %v648, %v632
    %v857 = vpack.c.b16 %v649, %v633
    %v858 = vpack.c.b16 %v650, %v634
    %v859 = vpack.c.b16 %v651, %v635
    %v860 = vpack.c.b16 %v652, %v636
    %v861 = vpack.c.b16 %v653, %v637
    %v862 = vpack.c.b16 %v654, %v638
    %v863 = vpack.c.b16 %v655, %v639
    %v864 = vpack.c.b16 %v656, %v640
    %v865 = vpack.c.b16 %v673, %v657
    %v866 = vpack.c.b16 %v674, %v658
    %v867 = vpack.c.b16 %v675, %v659
    %v868 = vpack.c.b16 %v676, %v660
    %v869 = vpack.c.b16 %v677, %v661
    %v870 = vpack.c.b16 %v678, %v662
    %v871 = vpack.c.b16 %v679, %v663
    %v872 = vpack.c.b16 %v680, %v664
    %v873 = vpack.c.b16 %v681, %v665
    %v874 = vpack.c.b16 %v682, %v666
    %v875 = vpack.c.b16 %v683, %v667
    %v876 = vpack.c.b16 %v684, %v668
    %v877 = vpack.c.b16 %v685, %v669
    %v878 = vpack.c.b16 %v686, %v670
    %v879 = vpack.c.b16 %v687, %v671
    %v880 = vpack.c.b16 %v688, %v672
    %v881 = vpack.c.b16 %v705, %v689
    %v882 = vpack.c.b16 %v706, %v690
    %v883 = vpack.c.b16 %v707, %v691
    %v884 = vpack.c.b16 %v708, %v692
    %v885 = vpack.c.b16 %v709, %v693
    %v886 = vpack.c.b16 %v710, %v694
    %v887 = vpack.c.b16 %v711, %v695
    %v888 = vpack.c.b16 %v712, %v696
    %v889 = vpack.c.b16 %v713, %v697
    %v890 = vpack.c.b16 %v714, %v698
    %v891 = vpack.c.b16 %v715, %v699
    %v892 = vpack.c.b16 %v716, %v700
    %v893 = vpack.c.b16 %v717, %v701
    %v894 = vpack.c.b16 %v718, %v702
    %v895 = vpack.c.b16 %v719, %v703
    %v896 = vpack.c.b16 %v720, %v704
    %v897 = vpack.c.b16 %v737, %v721
    %v898 = vpack.c.b16 %v738, %v722
    %v899 = vpack.c.b16 %v739, %v723
    %v900 = vpack.c.b16 %v740, %v724
    %v901 = vpack.c.b16 %v741, %v725
    %v902 = vpack.c.b16 %v742, %v726
    %v903 = vpack.c.b16 %v743, %v727
    %v904 = vpack.c.b16 %v744, %v728
    %v905 = vpack.c.b16 %v745, %v729
    %v906 = vpack.c.b16 %v746, %v730
    %v907 = vpack.c.b16 %v747, %v731
    %v908 = vpack.c.b16 %v748, %v732
    %v909 = vpack.c.b16 %v749, %v733
    %v910 = vpack.c.b16 %v750, %v734
    %v911 = vpack.c.b16 %v751, %v735
    %v912 = vpack.c.b16 %v752, %v736
    %v913 = vpack.c.b16 %v769, %v753
    %v914 = vpack.c.b16 %v770, %v754
    %v915 = vpack.c.b16 %v771, %v755
    %v916 = vpack.c.b16 %v772, %v756
    %v917 = vpack.c.b16 %v773, %v757
    %v918 = vpack.c.b16 %v774, %v758
    %v919 = vpack.c.b16 %v775, %v759
    %v920 = vpack.c.b16 %v776, %v760
    %v921 = vpack.c.b16 %v777, %v761
    %v922 = vpack.c.b16 %v778, %v762
    %v923 = vpack.c.b16 %v779, %v763
    %v924 = vpack.c.b16 %v780, %v764
    %v925 = vpack.c.b16 %v781, %v765
    %v926 = vpack.c.b16 %v782, %v766
    %v927 = vpack.c.b16 %v783, %v767
    %v928 = vpack.c.b16 %v784, %v768
    %v929 = vpack.c.b16 %v801, %v785
    %v930 = vpack.c.b16 %v802, %v786
    %v931 = vpack.c.b16 %v803, %v787
    %v932 = vpack.c.b16 %v804, %v788
    %v933 = vpack.c.b16 %v805, %v789
    %v934 = vpack.c.b16 %v806, %v790
    %v935 = vpack.c.b16 %v807, %v791
    %v936 = vpack.c.b16 %v808, %v792
    %v937 = vpack.c.b16 %v809, %v793
    %v938 = vpack.c.b16 %v810, %v794
    %v939 = vpack.c.b16 %v811, %v795
    %v940 = vpack.c.b16 %v812, %v796
    %v941 = vpack.c.b16 %v813, %v797
    %v942 = vpack.c.b16 %v814, %v798
    %v943 = vpack.c.b16 %v815, %v799
    %v944 = vpack.c.b16 %v816, %v800
    %1073 = vmatprep.subr.bf16.mxu0 %v818
    %1074 = vmatpush1.bf16.msra.mxu0 %v817
    %1075 = vmatprep.subr.bf16.mxu0 %v834
    %1076 = vmatpush1.bf16.msra.mxu0 %v833
    %1077 = vmatprep.subr.bf16.mxu0 %v850
    %1078 = vmatpush1.bf16.msra.mxu0 %v849
    %1079 = vmatprep.subr.bf16.mxu0 %v866
    %1080 = vmatpush1.bf16.msra.mxu0 %v865
    %1081 = vmatprep.subr.bf16.mxu0 %v882
    %1082 = vmatpush1.bf16.msra.mxu0 %v881
    %1083 = vmatprep.subr.bf16.mxu0 %v898
    %1084 = vmatpush1.bf16.msra.mxu0 %v897
    %1085 = vmatprep.subr.bf16.mxu0 %v914
    %1086 = vmatpush1.bf16.msra.mxu0 %v913
    %1087 = vmatprep.subr.bf16.mxu0 %v930
    %1088 = vmatpush1.bf16.msra.mxu0 %v929
    %1089 = vmatprep.subr.bf16.mxu0 0
    %1090 = vmatpush1.bf16.msra.mxu0 0
    %1091 = vmatprep.subr.bf16.mxu0 0
    %1092 = vmatpush1.bf16.msra.mxu0 0
    %1093 = vmatprep.subr.bf16.mxu0 0
    %1094 = vmatpush1.bf16.msra.mxu0 0
    %1095 = vmatprep.subr.bf16.mxu0 0
    %1096 = vmatpush1.bf16.msra.mxu0 0
    %1097 = vmatprep.subr.bf16.mxu0 0
    %1098 = vmatpush1.bf16.msra.mxu0 0
    %1099 = vmatprep.subr.bf16.mxu0 0
    %1100 = vmatpush1.bf16.msra.mxu0 0
    %1101 = vmatprep.subr.bf16.mxu0 0
    %1102 = vmatpush1.bf16.msra.mxu0 0
    %1103 = vmatprep.subr.bf16.mxu0 0
    %1104 = vmatpush1.bf16.msra.mxu0 0
    %1105 = vmatprep.mubr.bf16.mxu0 0
    %1106 = vmatmul.mubr.bf16.gmra.mrb[0].mxu0 %v220
    %v1107 = vpop.f32.mrb[0].mxu0
    %v1108 = vadd.f32 %v356, %v1107
    %v1109 = vpop.f32.mrb[0].mxu0
    %v1110 = vadd.f32 %v360, %v1109
    %v1111 = vpop.f32.mrb[0].mxu0
    %v1112 = vpop.f32.mrb[0].mxu0
    %1113 = vdwg.mxu0
    %1114 = vmatprep.subr.bf16.mxu0 %v820
    %1115 = vmatpush1.bf16.msra.mxu0 %v819
    %1116 = vmatprep.subr.bf16.mxu0 %v836
    %1117 = vmatpush1.bf16.msra.mxu0 %v835
    %1118 = vmatprep.subr.bf16.mxu0 %v852
    %1119 = vmatpush1.bf16.msra.mxu0 %v851
    %1120 = vmatprep.subr.bf16.mxu0 %v868
    %1121 = vmatpush1.bf16.msra.mxu0 %v867
    %1122 = vmatprep.subr.bf16.mxu0 %v884
    %1123 = vmatpush1.bf16.msra.mxu0 %v883
    %1124 = vmatprep.subr.bf16.mxu0 %v900
    %1125 = vmatpush1.bf16.msra.mxu0 %v899
    %1126 = vmatprep.subr.bf16.mxu0 %v916
    %1127 = vmatpush1.bf16.msra.mxu0 %v915
    %1128 = vmatprep.subr.bf16.mxu0 %v932
    %1129 = vmatpush1.bf16.msra.mxu0 %v931
    %1130 = vmatprep.subr.bf16.mxu0 0
    %1131 = vmatpush1.bf16.msra.mxu0 0
    %1132 = vmatprep.subr.bf16.mxu0 0
    %1133 = vmatpush1.bf16.msra.mxu0 0
    %1134 = vmatprep.subr.bf16.mxu0 0
    %1135 = vmatpush1.bf16.msra.mxu0 0
    %1136 = vmatprep.subr.bf16.mxu0 0
    %1137 = vmatpush1.bf16.msra.mxu0 0
    %1138 = vmatprep.subr.bf16.mxu0 0
    %1139 = vmatpush1.bf16.msra.mxu0 0
    %1140 = vmatprep.subr.bf16.mxu0 0
    %1141 = vmatpush1.bf16.msra.mxu0 0
    %1142 = vmatprep.subr.bf16.mxu0 0
    %1143 = vmatpush1.bf16.msra.mxu0 0
    %1144 = vmatprep.subr.bf16.mxu0 0
    %1145 = vmatpush1.bf16.msra.mxu0 0
    %1146 = vmatprep.mubr.bf16.mxu0 0
    %1147 = vmatmul.mubr.bf16.gmra.mrb[0].mxu0 %v220
    %v1148 = vpop.f32.mrb[0].mxu0
    %v1149 = vadd.f32 %v364, %v1148
    %v1150 = vpop.f32.mrb[0].mxu0
    %v1151 = vadd.f32 %v368, %v1150
    %v1152 = vpop.f32.mrb[0].mxu0
    %v1153 = vpop.f32.mrb[0].mxu0
    %1154 = vdwg.mxu0
    %1155 = vmatprep.subr.bf16.mxu0 %v822
    %1156 = vmatpush1.bf16.msra.mxu0 %v821
    %1157 = vmatprep.subr.bf16.mxu0 %v838
    %1158 = vmatpush1.bf16.msra.mxu0 %v837
    %1159 = vmatprep.subr.bf16.mxu0 %v854
    %1160 = vmatpush1.bf16.msra.mxu0 %v853
    %1161 = vmatprep.subr.bf16.mxu0 %v870
    %1162 = vmatpush1.bf16.msra.mxu0 %v869
    %1163 = vmatprep.subr.bf16.mxu0 %v886
    %1164 = vmatpush1.bf16.msra.mxu0 %v885
    %1165 = vmatprep.subr.bf16.mxu0 %v902
    %1166 = vmatpush1.bf16.msra.mxu0 %v901
    %1167 = vmatprep.subr.bf16.mxu0 %v918
    %1168 = vmatpush1.bf16.msra.mxu0 %v917
    %1169 = vmatprep.subr.bf16.mxu0 %v934
    %1170 = vmatpush1.bf16.msra.mxu0 %v933
    %1171 = vmatprep.subr.bf16.mxu0 0
    %1172 = vmatpush1.bf16.msra.mxu0 0
    %1173 = vmatprep.subr.bf16.mxu0 0
    %1174 = vmatpush1.bf16.msra.mxu0 0
    %1175 = vmatprep.subr.bf16.mxu0 0
    %1176 = vmatpush1.bf16.msra.mxu0 0
    %1177 = vmatprep.subr.bf16.mxu0 0
    %1178 = vmatpush1.bf16.msra.mxu0 0
    %1179 = vmatprep.subr.bf16.mxu0 0
    %1180 = vmatpush1.bf16.msra.mxu0 0
    %1181 = vmatprep.subr.bf16.mxu0 0
    %1182 = vmatpush1.bf16.msra.mxu0 0
    %1183 = vmatprep.subr.bf16.mxu0 0
    %1184 = vmatpush1.bf16.msra.mxu0 0
    %1185 = vmatprep.subr.bf16.mxu0 0
    %1186 = vmatpush1.bf16.msra.mxu0 0
    %1187 = vmatprep.mubr.bf16.mxu0 0
    %1188 = vmatmul.mubr.bf16.gmra.mrb[0].mxu0 %v220
    %v1189 = vpop.f32.mrb[0].mxu0
    %v1190 = vadd.f32 %v372, %v1189
    %v1191 = vpop.f32.mrb[0].mxu0
    %v1192 = vadd.f32 %v376, %v1191
    %v1193 = vpop.f32.mrb[0].mxu0
    %v1194 = vpop.f32.mrb[0].mxu0
    %1195 = vdwg.mxu0
    %1196 = vmatprep.subr.bf16.mxu0 %v824
    %1197 = vmatpush1.bf16.msra.mxu0 %v823
    %1198 = vmatprep.subr.bf16.mxu0 %v840
    %1199 = vmatpush1.bf16.msra.mxu0 %v839
    %1200 = vmatprep.subr.bf16.mxu0 %v856
    %1201 = vmatpush1.bf16.msra.mxu0 %v855
    %1202 = vmatprep.subr.bf16.mxu0 %v872
    %1203 = vmatpush1.bf16.msra.mxu0 %v871
    %1204 = vmatprep.subr.bf16.mxu0 %v888
    %1205 = vmatpush1.bf16.msra.mxu0 %v887
    %1206 = vmatprep.subr.bf16.mxu0 %v904
    %1207 = vmatpush1.bf16.msra.mxu0 %v903
    %1208 = vmatprep.subr.bf16.mxu0 %v920
    %1209 = vmatpush1.bf16.msra.mxu0 %v919
    %1210 = vmatprep.subr.bf16.mxu0 %v936
    %1211 = vmatpush1.bf16.msra.mxu0 %v935
    %1212 = vmatprep.subr.bf16.mxu0 0
    %1213 = vmatpush1.bf16.msra.mxu0 0
    %1214 = vmatprep.subr.bf16.mxu0 0
    %1215 = vmatpush1.bf16.msra.mxu0 0
    %1216 = vmatprep.subr.bf16.mxu0 0
    %1217 = vmatpush1.bf16.msra.mxu0 0
    %1218 = vmatprep.subr.bf16.mxu0 0
    %1219 = vmatpush1.bf16.msra.mxu0 0
    %1220 = vmatprep.subr.bf16.mxu0 0
    %1221 = vmatpush1.bf16.msra.mxu0 0
    %1222 = vmatprep.subr.bf16.mxu0 0
    %1223 = vmatpush1.bf16.msra.mxu0 0
    %1224 = vmatprep.subr.bf16.mxu0 0
    %1225 = vmatpush1.bf16.msra.mxu0 0
    %1226 = vmatprep.subr.bf16.mxu0 0
    %1227 = vmatpush1.bf16.msra.mxu0 0
    %1228 = vmatprep.mubr.bf16.mxu0 0
    %1229 = vmatmul.mubr.bf16.gmra.mrb[0].mxu0 %v220
    %v1230 = vpop.f32.mrb[0].mxu0
    %v1231 = vadd.f32 %v380, %v1230
    %v1232 = vpop.f32.mrb[0].mxu0
    %v1233 = vadd.f32 %v384, %v1232
    %v1234 = vpop.f32.mrb[0].mxu0
    %v1235 = vpop.f32.mrb[0].mxu0
    %1236 = vdwg.mxu0
    %1237 = vmatprep.subr.bf16.mxu0 %v826
    %1238 = vmatpush1.bf16.msra.mxu0 %v825
    %1239 = vmatprep.subr.bf16.mxu0 %v842
    %1240 = vmatpush1.bf16.msra.mxu0 %v841
    %1241 = vmatprep.subr.bf16.mxu0 %v858
    %1242 = vmatpush1.bf16.msra.mxu0 %v857
    %1243 = vmatprep.subr.bf16.mxu0 %v874
    %1244 = vmatpush1.bf16.msra.mxu0 %v873
    %1245 = vmatprep.subr.bf16.mxu0 %v890
    %1246 = vmatpush1.bf16.msra.mxu0 %v889
    %1247 = vmatprep.subr.bf16.mxu0 %v906
    %1248 = vmatpush1.bf16.msra.mxu0 %v905
    %1249 = vmatprep.subr.bf16.mxu0 %v922
    %1250 = vmatpush1.bf16.msra.mxu0 %v921
    %1251 = vmatprep.subr.bf16.mxu0 %v938
    %1252 = vmatpush1.bf16.msra.mxu0 %v937
    %1253 = vmatprep.subr.bf16.mxu0 0
    %1254 = vmatpush1.bf16.msra.mxu0 0
    %1255 = vmatprep.subr.bf16.mxu0 0
    %1256 = vmatpush1.bf16.msra.mxu0 0
    %1257 = vmatprep.subr.bf16.mxu0 0
    %1258 = vmatpush1.bf16.msra.mxu0 0
    %1259 = vmatprep.subr.bf16.mxu0 0
    %1260 = vmatpush1.bf16.msra.mxu0 0
    %1261 = vmatprep.subr.bf16.mxu0 0
    %1262 = vmatpush1.bf16.msra.mxu0 0
    %1263 = vmatprep.subr.bf16.mxu0 0
    %1264 = vmatpush1.bf16.msra.mxu0 0
    %1265 = vmatprep.subr.bf16.mxu0 0
    %1266 = vmatpush1.bf16.msra.mxu0 0
    %1267 = vmatprep.subr.bf16.mxu0 0
    %1268 = vmatpush1.bf16.msra.mxu0 0
    %1269 = vmatprep.mubr.bf16.mxu0 0
    %1270 = vmatmul.mubr.bf16.gmra.mrb[0].mxu0 %v220
    %v1271 = vpop.f32.mrb[0].mxu0
    %v1272 = vadd.f32 %v388, %v1271
    %v1273 = vpop.f32.mrb[0].mxu0
    %v1274 = vadd.f32 %v392, %v1273
    %v1275 = vpop.f32.mrb[0].mxu0
    %v1276 = vpop.f32.mrb[0].mxu0
    %1277 = vdwg.mxu0
    %1278 = vmatprep.subr.bf16.mxu0 %v828
    %1279 = vmatpush1.bf16.msra.mxu0 %v827
    %1280 = vmatprep.subr.bf16.mxu0 %v844
    %1281 = vmatpush1.bf16.msra.mxu0 %v843
    %1282 = vmatprep.subr.bf16.mxu0 %v860
    %1283 = vmatpush1.bf16.msra.mxu0 %v859
    %1284 = vmatprep.subr.bf16.mxu0 %v876
    %1285 = vmatpush1.bf16.msra.mxu0 %v875
    %1286 = vmatprep.subr.bf16.mxu0 %v892
    %1287 = vmatpush1.bf16.msra.mxu0 %v891
    %1288 = vmatprep.subr.bf16.mxu0 %v908
    %1289 = vmatpush1.bf16.msra.mxu0 %v907
    %1290 = vmatprep.subr.bf16.mxu0 %v924
    %1291 = vmatpush1.bf16.msra.mxu0 %v923
    %1292 = vmatprep.subr.bf16.mxu0 %v940
    %1293 = vmatpush1.bf16.msra.mxu0 %v939
    %1294 = vmatprep.subr.bf16.mxu0 0
    %1295 = vmatpush1.bf16.msra.mxu0 0
    %1296 = vmatprep.subr.bf16.mxu0 0
    %1297 = vmatpush1.bf16.msra.mxu0 0
    %1298 = vmatprep.subr.bf16.mxu0 0
    %1299 = vmatpush1.bf16.msra.mxu0 0
    %1300 = vmatprep.subr.bf16.mxu0 0
    %1301 = vmatpush1.bf16.msra.mxu0 0
    %1302 = vmatprep.subr.bf16.mxu0 0
    %1303 = vmatpush1.bf16.msra.mxu0 0
    %1304 = vmatprep.subr.bf16.mxu0 0
    %1305 = vmatpush1.bf16.msra.mxu0 0
    %1306 = vmatprep.subr.bf16.mxu0 0
    %1307 = vmatpush1.bf16.msra.mxu0 0
    %1308 = vmatprep.subr.bf16.mxu0 0
    %1309 = vmatpush1.bf16.msra.mxu0 0
    %1310 = vmatprep.mubr.bf16.mxu0 0
    %1311 = vmatmul.mubr.bf16.gmra.mrb[0].mxu0 %v220
    %v1312 = vpop.f32.mrb[0].mxu0
    %v1313 = vadd.f32 %v396, %v1312
    %v1314 = vpop.f32.mrb[0].mxu0
    %v1315 = vadd.f32 %v400, %v1314
    %v1316 = vpop.f32.mrb[0].mxu0
    %v1317 = vpop.f32.mrb[0].mxu0
    %1318 = vdwg.mxu0
    %1319 = vmatprep.subr.bf16.mxu0 %v830
    %1320 = vmatpush1.bf16.msra.mxu0 %v829
    %1321 = vmatprep.subr.bf16.mxu0 %v846
    %1322 = vmatpush1.bf16.msra.mxu0 %v845
    %1323 = vmatprep.subr.bf16.mxu0 %v862
    %1324 = vmatpush1.bf16.msra.mxu0 %v861
    %1325 = vmatprep.subr.bf16.mxu0 %v878
    %1326 = vmatpush1.bf16.msra.mxu0 %v877
    %1327 = vmatprep.subr.bf16.mxu0 %v894
    %1328 = vmatpush1.bf16.msra.mxu0 %v893
    %1329 = vmatprep.subr.bf16.mxu0 %v910
    %1330 = vmatpush1.bf16.msra.mxu0 %v909
    %1331 = vmatprep.subr.bf16.mxu0 %v926
    %1332 = vmatpush1.bf16.msra.mxu0 %v925
    %1333 = vmatprep.subr.bf16.mxu0 %v942
    %1334 = vmatpush1.bf16.msra.mxu0 %v941
    %1335 = vmatprep.subr.bf16.mxu0 0
    %1336 = vmatpush1.bf16.msra.mxu0 0
    %1337 = vmatprep.subr.bf16.mxu0 0
    %1338 = vmatpush1.bf16.msra.mxu0 0
    %1339 = vmatprep.subr.bf16.mxu0 0
    %1340 = vmatpush1.bf16.msra.mxu0 0
    %1341 = vmatprep.subr.bf16.mxu0 0
    %1342 = vmatpush1.bf16.msra.mxu0 0
    %1343 = vmatprep.subr.bf16.mxu0 0
    %1344 = vmatpush1.bf16.msra.mxu0 0
    %1345 = vmatprep.subr.bf16.mxu0 0
    %1346 = vmatpush1.bf16.msra.mxu0 0
    %1347 = vmatprep.subr.bf16.mxu0 0
    %1348 = vmatpush1.bf16.msra.mxu0 0
    %1349 = vmatprep.subr.bf16.mxu0 0
    %1350 = vmatpush1.bf16.msra.mxu0 0
    %1351 = vmatprep.mubr.bf16.mxu0 0
    %1352 = vmatmul.mubr.bf16.gmra.mrb[0].mxu0 %v220
    %v1353 = vpop.f32.mrb[0].mxu0
    %v1354 = vadd.f32 %v404, %v1353
    %v1355 = vpop.f32.mrb[0].mxu0
    %v1356 = vadd.f32 %v408, %v1355
    %v1357 = vpop.f32.mrb[0].mxu0
    %v1358 = vpop.f32.mrb[0].mxu0
    %1359 = vdwg.mxu0
    %1360 = vmatprep.subr.bf16.mxu0 %v832
    %1361 = vmatpush1.bf16.msra.mxu0 %v831
    %1362 = vmatprep.subr.bf16.mxu0 %v848
    %1363 = vmatpush1.bf16.msra.mxu0 %v847
    %1364 = vmatprep.subr.bf16.mxu0 %v864
    %1365 = vmatpush1.bf16.msra.mxu0 %v863
    %1366 = vmatprep.subr.bf16.mxu0 %v880
    %1367 = vmatpush1.bf16.msra.mxu0 %v879
    %1368 = vmatprep.subr.bf16.mxu0 %v896
    %1369 = vmatpush1.bf16.msra.mxu0 %v895
    %1370 = vmatprep.subr.bf16.mxu0 %v912
    %1371 = vmatpush1.bf16.msra.mxu0 %v911
    %1372 = vmatprep.subr.bf16.mxu0 %v928
    %1373 = vmatpush1.bf16.msra.mxu0 %v927
    %1374 = vmatprep.subr.bf16.mxu0 %v944
    %1375 = vmatpush1.bf16.msra.mxu0 %v943
    %1376 = vmatprep.subr.bf16.mxu0 0
    %1377 = vmatpush1.bf16.msra.mxu0 0
    %1378 = vmatprep.subr.bf16.mxu0 0
    %1379 = vmatpush1.bf16.msra.mxu0 0
    %1380 = vmatprep.subr.bf16.mxu0 0
    %1381 = vmatpush1.bf16.msra.mxu0 0
    %1382 = vmatprep.subr.bf16.mxu0 0
    %1383 = vmatpush1.bf16.msra.mxu0 0
    %1384 = vmatprep.subr.bf16.mxu0 0
    %1385 = vmatpush1.bf16.msra.mxu0 0
    %1386 = vmatprep.subr.bf16.mxu0 0
    %1387 = vmatpush1.bf16.msra.mxu0 0
    %1388 = vmatprep.subr.bf16.mxu0 0
    %1389 = vmatpush1.bf16.msra.mxu0 0
    %1390 = vmatprep.subr.bf16.mxu0 0
    %1391 = vmatpush1.bf16.msra.mxu0 0
    %1392 = vmatprep.mubr.bf16.mxu0 0
    %1393 = vmatmul.mubr.bf16.gmra.mrb[0].mxu0 %v220
    %v1394 = vpop.f32.mrb[0].mxu0
    %v1395 = vadd.f32 %v412, %v1394
    %v1396 = vpop.f32.mrb[0].mxu0
    %v1397 = vadd.f32 %v416, %v1396
    %v1398 = vpop.f32.mrb[0].mxu0
    %v1399 = vpop.f32.mrb[0].mxu0
    %1400 = vdwg.mxu0
    %1401 = vst [vmem:[#allocation11] sm:$0xff] %v1108
    %1402 = vst [vmem:[#allocation11 + $0x8] sm:$0xff] %v1110
    %1403 = vst [vmem:[#allocation11 + $0x10] sm:$0xff] %v1149
    %1404 = vst [vmem:[#allocation11 + $0x18] sm:$0xff] %v1151
    %1405 = vst [vmem:[#allocation11 + $0x20] sm:$0xff] %v1190
    %1406 = vst [vmem:[#allocation11 + $0x28] sm:$0xff] %v1192
    %1407 = vst [vmem:[#allocation11 + $0x30] sm:$0xff] %v1231
    %1408 = vst [vmem:[#allocation11 + $0x38] sm:$0xff] %v1233
    %1409 = vst [vmem:[#allocation11 + $0x40] sm:$0xff] %v1272
    %1410 = vst [vmem:[#allocation11 + $0x48] sm:$0xff] %v1274
    %1411 = vst [vmem:[#allocation11 + $0x50] sm:$0xff] %v1313
    %1412 = vst [vmem:[#allocation11 + $0x58] sm:$0xff] %v1315
    %1413 = vst [vmem:[#allocation11 + $0x60] sm:$0xff] %v1354
    %1414 = vst [vmem:[#allocation11 + $0x68] sm:$0xff] %v1356
    %1415 = vst [vmem:[#allocation11 + $0x70] sm:$0xff] %v1395
    %1416 = vst [vmem:[#allocation11 + $0x78] sm:$0xff] %v1397
    // Predicated region
    $region42: #{tpu_custom_call.1} parent=1 // pred_check
      _
    $region43: #{tpu_custom_call.1} parent=1 // pred_check_branch
      %1418 = sbr.rel (0) target = $region45
    $region44: #{tpu_custom_call.1} parent=1 // pred_region
      %s1420 = ssub.s32 2048, 2048
      %1421 = vsyncadd [#allocation5], %s1420
      %s1423 = sshll.u32 [#allocation11], 4
      %s1424 = int_to_ptr.vmem [resolvable:$true] %s1423
      %1426 = dma.vmem_to_hbm [thread:$0]  %s1424, 2048, %s5, [#allocation5]
    $region45: #{tpu_custom_call.1} parent=1 // pred_fallthru
      _
    // Predicated region
    $region46: #{tpu_custom_call.1} parent=1 // pred_check
      _
    $region47: #{tpu_custom_call.1} parent=1 // pred_check_branch
      %1428 = sbr.rel (0) target = $region49
    $region48: #{tpu_custom_call.1} parent=1 // pred_region
      %1429 = dma.done [#allocation5], 2048
    $region49: #{tpu_custom_call.1} parent=1 // pred_fallthru
      _
    %1430 = vsyncpa [#allocation4], 1
    %1431 = vsyncpa [#allocation7], 1
    %1432 = vsyncpa [#allocation10], 1
    %1433 = vsyncpa [#allocation5], 1

</llo_original>
